<compile_context>
chip_gen: v7x
topology: tpu7x:2x2x1
jax: 0.10.0
libtpu: 0.0.40
codegen_flags: <defaults>
</compile_context>

<pallas_src>
import jax
import jax.numpy as jnp
from jax.experimental import pallas as pl
from jax.experimental.pallas import tpu as pltpu


def hm_head_kernel(x_ref, w1_ref, bias1_ref, w2_ref, b2_ref, o_ref):
    # x_ref:     (C_in, tp)   pixel tile, channels on sublanes, pixels on lanes
    # w1_ref:    (C_mid, C_in) BN-folded first 1x1 conv weight (out, in)
    # bias1_ref: (C_mid, 1)    fused conv1 bias + BN bias (f32)
    # w2_ref:    (C_out, C_mid) second 1x1 conv weight (out, in)
    # b2_ref:    (C_out, 1)    second conv bias (f32)
    # o_ref:     (C_out, tp)
    x = x_ref[...].astype(w1_ref.dtype)          # in-VMEM cast only (if any)
    # Conv1 + folded BN: MXU matmul, f32 accumulation.
    h = jnp.dot(w1_ref[...], x, preferred_element_type=jnp.float32)
    h = jnp.maximum(h + bias1_ref[...], 0.0)     # bias + ReLU on the VPU
    # Conv2: (C_out, C_mid) @ (C_mid, tp) -> (C_out, tp); no transposes.
    o = jnp.dot(w2_ref[...], h.astype(w2_ref.dtype),
                preferred_element_type=jnp.float32)
    o_ref[...] = (o + b2_ref[...]).astype(o_ref.dtype)


def _round_up(x, m):
    return ((x + m - 1) // m) * m


def hm_head_pallas(feat_nchw, params, *, tp_cap=8192, compute_dtype=None,
                   vmem_limit_bytes=None):
    """feat_nchw: [N, C_in, H, W] backbone output. Returns [N, C_out, H, W].

    params = (w1, b1, bn_scale, bn_bias, w2, b2) as produced by make_params.
    BatchNorm is eval-mode and folded into the first conv here.
    tp_cap: pixel-tile cap (multiple of 128). 8192 is safe on v5e/v6e/v7x;
            raise to 16-32K on v6e (with vmem_limit_bytes) if desired.
    """
    w1, b1, bn_scale, bn_bias, w2, b2 = params
    N, C_in, H, W = feat_nchw.shape
    C_mid = w1.shape[1]
    C_out = w2.shape[1]
    out_dtype = feat_nchw.dtype
    dt = compute_dtype if compute_dtype is not None else feat_nchw.dtype

    # ---- fold BN into conv1; pre-orient weights (out, in): no in-kernel .T ----
    w1t = (w1 * bn_scale).T.astype(dt)                        # (C_mid, C_in)
    bias1 = (b1 * bn_scale + bn_bias).reshape(C_mid, 1).astype(jnp.float32)
    w2t = w2.T.astype(dt)                                     # (C_out, C_mid)
    b2c = b2.reshape(C_out, 1).astype(jnp.float32)

    # ---- native NCHW flatten; NO pad, NO cast (no extra HBM passes) ----
    HW = H * W
    x3 = feat_nchw.reshape(N, C_in, HW)

    tp = min(_round_up(tp_cap, 128), _round_up(HW, 128))      # multiple of 128
    if N == 1 and HW > 256:
        # ensure >=2 grid steps so both v7x TensorCores get work
        tp = min(tp, _round_up(-(-HW // 2), 128))
    n_pix_blocks = pl.cdiv(HW, tp)
    grid = (N, n_pix_blocks)

    x_item = jnp.dtype(feat_nchw.dtype).itemsize
    o_item = jnp.dtype(out_dtype).itemsize
    w_item = jnp.dtype(dt).itemsize

    # VMEM budget: double-buffered x/out tiles + resident f32 intermediates.
    est = (2 * C_in * tp * x_item
           + 2 * C_out * tp * o_item
           + C_mid * tp * 4 + C_out * tp * 4
           + 2 * ((C_mid * C_in + C_out * C_mid) * w_item + (C_mid + C_out) * 4))
    if vmem_limit_bytes is None:
        vmem_limit_bytes = int(min(100 * 2**20, max(32 * 2**20, est * 2)))

    M = N * HW
    cost = pl.CostEstimate(
        flops=2 * M * (C_in * C_mid + C_mid * C_out),
        transcendentals=0,
        bytes_accessed=(M * C_in * x_item                     # activations in
                        + M * C_out * o_item                  # heatmaps out
                        + (C_mid * C_in + C_out * C_mid) * w_item
                        + (C_mid + C_out) * 4))

    out3 = pl.pallas_call(
        hm_head_kernel,
        out_shape=jax.ShapeDtypeStruct((N, C_out, HW), out_dtype),
        grid_spec=pltpu.PrefetchScalarGridSpec(
            num_scalar_prefetch=0,
            grid=grid,
            in_specs=[
                # x tile: (C_in, tp) — channels on sublanes, pixels on lanes
                pl.BlockSpec((None, C_in, tp), lambda n, p: (n, 0, p)),
                # block-index-invariant weights / biases (stay resident in VMEM)
                pl.BlockSpec((C_mid, C_in), lambda n, p: (0, 0)),
                pl.BlockSpec((C_mid, 1), lambda n, p: (0, 0)),
                pl.BlockSpec((C_out, C_mid), lambda n, p: (0, 0)),
                pl.BlockSpec((C_out, 1), lambda n, p: (0, 0)),
            ],
            # lane-dense output tile: last dim = tp (multiple of 128)
            out_specs=pl.BlockSpec((None, C_out, tp), lambda n, p: (n, 0, p)),
        ),
        compiler_params=pltpu.CompilerParams(
            dimension_semantics=("parallel", "parallel"),
            vmem_limit_bytes=vmem_limit_bytes),
        cost_estimate=cost,
    )(x3, w1t, bias1, w2t, b2c)

    return out3.reshape(N, C_out, H, W)


def make_params(key, c_in, c_mid, c_out, dtype=jnp.float32):
    """Deterministic synthetic parameters for the hm_conv head."""
    k1, k2, k3, k4, k5, k6, k7, k8 = jax.random.split(key, 8)
    # Conv2d(c_in, c_mid, 1x1) in matmul layout (c_in, c_mid)
    w1 = jax.random.normal(k1, (c_in, c_mid), dtype) * 0.1
    b1 = jax.random.normal(k2, (1, c_mid), dtype) * 0.05
    # BatchNorm2d(c_mid) params / running stats (eval mode), pre-folded
    gamma = 1.0 + 0.1 * jax.random.normal(k3, (1, c_mid), dtype)
    beta = 0.05 * jax.random.normal(k4, (1, c_mid), dtype)
    run_mean = 0.05 * jax.random.normal(k5, (1, c_mid), dtype)
    run_var = 1.0 + 0.1 * jax.random.uniform(k6, (1, c_mid), dtype)
    eps = 1e-5
    bn_scale = gamma / jnp.sqrt(run_var + eps)
    bn_bias = beta - run_mean * bn_scale
    # Conv2d(c_mid, c_out, 1x1)
    w2 = jax.random.normal(k7, (c_mid, c_out), dtype) * 0.1
    b2 = jax.random.normal(k8, (1, c_out), dtype) * 0.05
    return (w1, b1, bn_scale, bn_bias, w2, b2)


def hm_head_ref(feat_nchw, params):
    """Pure-JAX reference of the same head (correctness check)."""
    w1, b1, bn_scale, bn_bias, w2, b2 = params
    N, C_in, H, W = feat_nchw.shape
    x2d = jnp.transpose(feat_nchw, (0, 2, 3, 1)).reshape(-1, C_in)
    h = x2d @ w1 + b1
    h = h * bn_scale + bn_bias
    h = jnp.maximum(h, 0.0)
    o = h @ w2 + b2
    o = o.reshape(N, H, W, -1)
    return jnp.transpose(o, (0, 3, 1, 2))


if __name__ == "__main__":
    # Small shapes consistent with the module (mobilenetv2 -> outsize=32).
    N, C_IN, H, W = 2, 32, 16, 16          # backbone feature map
    C_MID = 128                            # hm_conv hidden channels
    N_LOCATIONS, N_LIMBS = 5, 3
    C_OUT = N_LOCATIONS + N_LIMBS

    key = jax.random.PRNGKey(0)
    k_feat, k_par = jax.random.split(key)
    feat = jax.random.normal(k_feat, (N, C_IN, H, W), jnp.float32)
    params = make_params(k_par, C_IN, C_MID, C_OUT)

    ref = hm_head_ref(feat, params)

    # f32 path
    heatmaps = hm_head_pallas(feat, params)
    heatmaps = jax.block_until_ready(heatmaps)
    assert heatmaps.shape == (N, C_OUT, H, W)
    assert jnp.allclose(heatmaps, ref, atol=1e-3, rtol=1e-3), (
        float(jnp.max(jnp.abs(heatmaps - ref))))

    # bf16 matmul path (in-kernel cast; useful when the backbone emits bf16)
    heatmaps_bf16 = hm_head_pallas(feat, params, compute_dtype=jnp.bfloat16)
    heatmaps_bf16 = jax.block_until_ready(heatmaps_bf16)
    assert heatmaps_bf16.shape == (N, C_OUT, H, W)
    assert jnp.allclose(heatmaps_bf16, ref, atol=5e-2, rtol=5e-2), (
        float(jnp.max(jnp.abs(heatmaps_bf16 - ref))))

    print("KERNEL_OK")
</pallas_src>

<mosaic_0001>
module attributes {stable_mosaic.version = 11 : i64} {
  func.func @hm_head_kernel(%arg0: i32, %arg1: i32, %arg2: memref<1x32x256xf32, #tpu.memory_space<vmem>>, %arg3: memref<128x32xf32, #tpu.memory_space<vmem>>, %arg4: memref<128x1xf32, #tpu.memory_space<vmem>>, %arg5: memref<8x128xf32, #tpu.memory_space<vmem>>, %arg6: memref<8x1xf32, #tpu.memory_space<vmem>>, %arg7: memref<1x8x256xf32, #tpu.memory_space<vmem>>) attributes {dimension_semantics = [#tpu.dimension_semantics<parallel>, #tpu.dimension_semantics<parallel>], iteration_bounds = array<i64: 2, 1>, scalar_prefetch = 0 : i64, scratch_operands = 0 : i64, tpu.core_type = #tpu.core_type<tc>, window_params = [{transform_indices = @transform_0, window_bounds = array<i64: 1, 32, 256>}, {pipeline_mode = #tpu.pipeline_mode<synchronous>, transform_indices = @transform_1, window_bounds = array<i64: 128, 32>}, {pipeline_mode = #tpu.pipeline_mode<synchronous>, transform_indices = @transform_2, window_bounds = array<i64: 128, 1>}, {pipeline_mode = #tpu.pipeline_mode<synchronous>, transform_indices = @transform_3, window_bounds = array<i64: 8, 128>}, {pipeline_mode = #tpu.pipeline_mode<synchronous>, transform_indices = @transform_4, window_bounds = array<i64: 8, 1>}, {transform_indices = @transform_5, window_bounds = array<i64: 1, 8, 256>}]} {
    %c0 = arith.constant 0 : index
    %c0_0 = arith.constant 0 : index
    %c0_1 = arith.constant 0 : index
    %0 = vector.load %arg2[%c0, %c0_0, %c0_1] : memref<1x32x256xf32, #tpu.memory_space<vmem>>, vector<1x32x256xf32>
    %1 = vector.shape_cast %0 : vector<1x32x256xf32> to vector<32x256xf32>
    %c0_2 = arith.constant 0 : index
    %c0_3 = arith.constant 0 : index
    %2 = vector.load %arg3[%c0_2, %c0_3] : memref<128x32xf32, #tpu.memory_space<vmem>>, vector<128x32xf32>
    %cst = arith.constant dense<0.000000e+00> : vector<128x256xf32>
    %3 = tpu.matmul %2, %1, %cst {dimension_numbers = #tpu.dot_dimension_numbers<[1], [0], [0], [1], [0, 0, 1, 1], [], []>} : vector<128x32xf32>, vector<32x256xf32>, vector<128x256xf32> -> vector<128x256xf32>
    %c0_4 = arith.constant 0 : index
    %c0_5 = arith.constant 0 : index
    %4 = vector.load %arg4[%c0_4, %c0_5] : memref<128x1xf32, #tpu.memory_space<vmem>>, vector<128x1xf32>
    %5 = vector.broadcast %4 : vector<128x1xf32> to vector<128x256xf32>
    %6 = arith.addf %3, %5 : vector<128x256xf32>
    %cst_6 = arith.constant 0.000000e+00 : f32
    %7 = vector.broadcast %cst_6 : f32 to vector<128x256xf32>
    %8 = arith.maximumf %6, %7 : vector<128x256xf32>
    %c0_7 = arith.constant 0 : index
    %c0_8 = arith.constant 0 : index
    %9 = vector.load %arg5[%c0_7, %c0_8] : memref<8x128xf32, #tpu.memory_space<vmem>>, vector<8x128xf32>
    %cst_9 = arith.constant dense<0.000000e+00> : vector<8x256xf32>
    %10 = tpu.matmul %9, %8, %cst_9 {dimension_numbers = #tpu.dot_dimension_numbers<[1], [0], [0], [1], [0, 0, 1, 1], [], []>} : vector<8x128xf32>, vector<128x256xf32>, vector<8x256xf32> -> vector<8x256xf32>
    %c0_10 = arith.constant 0 : index
    %c0_11 = arith.constant 0 : index
    %11 = vector.load %arg6[%c0_10, %c0_11] : memref<8x1xf32, #tpu.memory_space<vmem>>, vector<8x1xf32>
    %12 = vector.broadcast %11 : vector<8x1xf32> to vector<8x256xf32>
    %13 = arith.addf %10, %12 : vector<8x256xf32>
    %c0_12 = arith.constant 0 : index
    %c0_13 = arith.constant 0 : index
    %c0_14 = arith.constant 0 : index
    %14 = vector.load %arg7[%c0_12, %c0_13, %c0_14] : memref<1x8x256xf32, #tpu.memory_space<vmem>>, vector<1x8x256xf32>
    %15 = vector.shape_cast %14 : vector<1x8x256xf32> to vector<8x256xf32>
    %16 = vector.shape_cast %13 : vector<8x256xf32> to vector<1x8x256xf32>
    tpu.vector_store %arg7[%c0_12, %c0_13, %c0_14], %16 {strides = array<i32>} : memref<1x8x256xf32, #tpu.memory_space<vmem>>, vector<1x8x256xf32>,
    return
  }
  func.func @transform_0(%arg0: i32, %arg1: i32) -> (i32, i32, i32) {
    %c0_i32 = arith.constant 0 : i32
    %c0_i32_0 = arith.constant 0 : i32
    return %arg0, %c0_i32, %arg1 : i32, i32, i32
  }
  func.func @transform_1(%arg0: i32, %arg1: i32) -> (i32, i32) {
    %c0_i32 = arith.constant 0 : i32
    %c0_i32_0 = arith.constant 0 : i32
    %c0_i32_1 = arith.constant 0 : i32
    return %c0_i32, %c0_i32_0 : i32, i32
  }
  func.func @transform_2(%arg0: i32, %arg1: i32) -> (i32, i32) {
    %c0_i32 = arith.constant 0 : i32
    %c0_i32_0 = arith.constant 0 : i32
    %c0_i32_1 = arith.constant 0 : i32
    return %c0_i32, %c0_i32_0 : i32, i32
  }
  func.func @transform_3(%arg0: i32, %arg1: i32) -> (i32, i32) {
    %c0_i32 = arith.constant 0 : i32
    %c0_i32_0 = arith.constant 0 : i32
    %c0_i32_1 = arith.constant 0 : i32
    return %c0_i32, %c0_i32_0 : i32, i32
  }
  func.func @transform_4(%arg0: i32, %arg1: i32) -> (i32, i32) {
    %c0_i32 = arith.constant 0 : i32
    %c0_i32_0 = arith.constant 0 : i32
    %c0_i32_1 = arith.constant 0 : i32
    return %c0_i32, %c0_i32_0 : i32, i32
  }
  func.func @transform_5(%arg0: i32, %arg1: i32) -> (i32, i32, i32) {
    %c0_i32 = arith.constant 0 : i32
    %c0_i32_0 = arith.constant 0 : i32
    return %arg0, %c0_i32, %arg1 : i32, i32, i32
  }
}

</mosaic_0001>

<llo_original>
// kernel: tpu_custom_call.1
$region0: #{tpu_custom_call.1}
  #allocation0 [shape = 'u32[]', space=smem, size = 0x4, offset = 0x4, fixed_abs, tag = 'smem constant byte address 0x4 - core index']
  #allocation1 [shape = 'u32[144,128]{1,0:T(1,128)}', space=vmem, size = 0x12000, scoped, tag = 'internal scratch']
  %s0 = inlined_call_operand.vmem [shape: f32[2,32,256], index: 0, kind: input, shape index: {}]
  %s1 = inlined_call_operand.vmem [shape: f32[128,32], index: 1, kind: input, shape index: {}]
  %s2 = inlined_call_operand.vmem [shape: f32[128,1], index: 2, kind: input, shape index: {}]
  %s3 = inlined_call_operand.vmem [shape: f32[8,128], index: 3, kind: input, shape index: {}]
  %s4 = inlined_call_operand.vmem [shape: f32[8,1], index: 4, kind: input, shape index: {}]
  %s5 = inlined_call_operand.hbm [shape: f32[2,8,256], index: 5, kind: output, shape index: {}]
  %s6 = sld [smem:[#allocation0]]
  $region53: #{tpu_custom_call.1} parent=0
    _
  %s8 = ssub.s32 1, %s6
  %s9 = scalar_select 0, %s8, %s6
  $region1: #{tpu_custom_call.1} parent=0
    #allocation2 [shape = 'u8[16384]{0}', space=vmem, size = 0x4000, scoped, tag = 'output window, operand 0']
    #allocation3 [shape = 's32[2]{0}', space=sflag, size = 0x8, scoped, tag = 'scoped memory for tpu_custom_call.1']
    %10 = vsyncpa [#allocation3], 0
    %s11 = scalar_lea.sflag [#allocation3], 1
    %12 = vsyncpa %s11, 0
    loop: start=0, step=1, limit=4
    $region2: #{tpu_custom_call.1} parent=1 // loop_pre_header
      _
    $region3: #{tpu_custom_call.1} parent=1 // loop_header
      %s14 = sphi 0, %s18
      %p15 = scmp.ge.s32.totalorder %s14, 4
      %s21 = sphi 0, %s33
      %s22 = sphi 0, %s29
      %s23 = sphi 0, %s21
      %s24 = sphi 0, %s22
      %s25 = sphi 0, %s23
      %s26 = sphi 0, %s24
      %s38 = sphi 0, %s40
      %s41 = sphi 0, %s38
      %s42 = sphi 0, %s41
      %s58 = sphi 0, %s42
      %s62 = sphi 0, %s62
      %s64 = sphi 0, %s62
      %s65 = sphi 0, %s64
      %s79 = sphi 0, %s65
      %s83 = sphi 0, %s83
      %s85 = sphi 0, %s83
      %s86 = sphi 0, %s85
      %s100 = sphi 0, %s86
      %s104 = sphi 0, %s104
      %s106 = sphi 0, %s104
      %s107 = sphi 0, %s106
      %s121 = sphi 0, %s107
      %s125 = sphi 0, %s125
      %s127 = sphi 0, %s125
      %s128 = sphi 0, %s127
      %s142 = sphi 0, %s128
      %s150 = sphi 0, %s152
      %s153 = sphi 0, %s150
      %s154 = sphi 0, %s153
      %s170 = sphi 0, %s154
    $region4: #{tpu_custom_call.1} parent=1 // loop_header_branch
      %17 = sbr.rel (%p15) target = $region8
    $region5: #{tpu_custom_call.1} parent=1 // loop_body
      %s19 = ssub.s32 %s14, 1
      %s20 = ssub.s32 %s14, 2
      %s27 = sadd.s32 1, %s22
      %p28 = scmp.ge.s32.totalorder %s27, 1
      %s29 = scalar_select %p28, 0, %s27
      %s30 = sadd.s32 1, %s21
      %s31 = scalar_select %p28, %s30, %s21
      %p32 = scmp.ge.s32.totalorder %s31, 2
      %s33 = scalar_select %p32, 0, %s31
      %s34 = ssub.s32 %s21, %s33
      %s35 = ssub.s32 %s22, %s29
      %s36 = sor.u32 %s34, %s35
      %p37 = scmp.eq.s32.totalorder %s36, 0
      %s39 = sadd.s32 %s38, 1
      %s40 = scalar_select %p37, %s38, %s39
      %p43 = pneg %p37
      %p44 = scmp.eq.s32.totalorder %s14, 1
      %p45 = por %p43, %p44
      %p46 = scmp.ne.s32.totalorder %s38, %s41
      %p47 = scmp.eq.s32.totalorder %s14, 0
      %p48 = por %p46, %p47
      %p49 = scmp.ne.s32.totalorder %s38, %s41
      %p50 = scmp.eq.s32.totalorder %s19, 1
      %p51 = por %p49, %p50
      %p52 = scmp.ne.s32.totalorder %s41, %s42
      %p53 = scmp.eq.s32.totalorder %s19, 0
      %p54 = por %p52, %p53
      %p55 = scmp.ne.s32.totalorder %s41, %s42
      %p56 = scmp.eq.s32.totalorder %s20, 1
      %p57 = por %p55, %p56
      %p59 = scmp.ne.s32.totalorder %s42, %s58
      %p60 = scmp.eq.s32.totalorder %s20, 0
      %p61 = por %p59, %p60
      %s63 = sadd.s32 %s62, 1
      %p66 = scmp.eq.s32.totalorder %s14, 1
      %p67 = scmp.ne.s32.totalorder %s62, %s64
      %p68 = scmp.eq.s32.totalorder %s14, 0
      %p69 = por %p67, %p68
      %p70 = scmp.ne.s32.totalorder %s62, %s64
      %p71 = scmp.eq.s32.totalorder %s19, 1
      %p72 = por %p70, %p71
      %p73 = scmp.ne.s32.totalorder %s64, %s65
      %p74 = scmp.eq.s32.totalorder %s19, 0
      %p75 = por %p73, %p74
      %p76 = scmp.ne.s32.totalorder %s64, %s65
      %p77 = scmp.eq.s32.totalorder %s20, 1
      %p78 = por %p76, %p77
      %p80 = scmp.ne.s32.totalorder %s65, %s79
      %p81 = scmp.eq.s32.totalorder %s20, 0
      %p82 = por %p80, %p81
      %s84 = sadd.s32 %s83, 1
      %p87 = scmp.eq.s32.totalorder %s14, 1
      %p88 = scmp.ne.s32.totalorder %s83, %s85
      %p89 = scmp.eq.s32.totalorder %s14, 0
      %p90 = por %p88, %p89
      %p91 = scmp.ne.s32.totalorder %s83, %s85
      %p92 = scmp.eq.s32.totalorder %s19, 1
      %p93 = por %p91, %p92
      %p94 = scmp.ne.s32.totalorder %s85, %s86
      %p95 = scmp.eq.s32.totalorder %s19, 0
      %p96 = por %p94, %p95
      %p97 = scmp.ne.s32.totalorder %s85, %s86
      %p98 = scmp.eq.s32.totalorder %s20, 1
      %p99 = por %p97, %p98
      %p101 = scmp.ne.s32.totalorder %s86, %s100
      %p102 = scmp.eq.s32.totalorder %s20, 0
      %p103 = por %p101, %p102
      %s105 = sadd.s32 %s104, 1
      %p108 = scmp.eq.s32.totalorder %s14, 1
      %p109 = scmp.ne.s32.totalorder %s104, %s106
      %p110 = scmp.eq.s32.totalorder %s14, 0
      %p111 = por %p109, %p110
      %p112 = scmp.ne.s32.totalorder %s104, %s106
      %p113 = scmp.eq.s32.totalorder %s19, 1
      %p114 = por %p112, %p113
      %p115 = scmp.ne.s32.totalorder %s106, %s107
      %p116 = scmp.eq.s32.totalorder %s19, 0
      %p117 = por %p115, %p116
      %p118 = scmp.ne.s32.totalorder %s106, %s107
      %p119 = scmp.eq.s32.totalorder %s20, 1
      %p120 = por %p118, %p119
      %p122 = scmp.ne.s32.totalorder %s107, %s121
      %p123 = scmp.eq.s32.totalorder %s20, 0
      %p124 = por %p122, %p123
      %s126 = sadd.s32 %s125, 1
      %p129 = scmp.eq.s32.totalorder %s14, 1
      %p130 = scmp.ne.s32.totalorder %s125, %s127
      %p131 = scmp.eq.s32.totalorder %s14, 0
      %p132 = por %p130, %p131
      %p133 = scmp.ne.s32.totalorder %s125, %s127
      %p134 = scmp.eq.s32.totalorder %s19, 1
      %p135 = por %p133, %p134
      %p136 = scmp.ne.s32.totalorder %s127, %s128
      %p137 = scmp.eq.s32.totalorder %s19, 0
      %p138 = por %p136, %p137
      %p139 = scmp.ne.s32.totalorder %s127, %s128
      %p140 = scmp.eq.s32.totalorder %s20, 1
      %p141 = por %p139, %p140
      %p143 = scmp.ne.s32.totalorder %s128, %s142
      %p144 = scmp.eq.s32.totalorder %s20, 0
      %p145 = por %p143, %p144
      %s146 = ssub.s32 %s21, %s33
      %s147 = ssub.s32 %s22, %s29
      %s148 = sor.u32 %s146, %s147
      %p149 = scmp.eq.s32.totalorder %s148, 0
      %s151 = sadd.s32 %s150, 1
      %s152 = scalar_select %p149, %s150, %s151
      %p155 = pneg %p149
      %p156 = scmp.eq.s32.totalorder %s14, 1
      %p157 = por %p155, %p156
      %p158 = scmp.ne.s32.totalorder %s150, %s153
      %p159 = scmp.eq.s32.totalorder %s14, 0
      %p160 = por %p158, %p159
      %p161 = scmp.ne.s32.totalorder %s150, %s153
      %p162 = scmp.eq.s32.totalorder %s19, 1
      %p163 = por %p161, %p162
      %p164 = scmp.ne.s32.totalorder %s153, %s154
      %p165 = scmp.eq.s32.totalorder %s19, 0
      %p166 = por %p164, %p165
      %p167 = scmp.ne.s32.totalorder %s153, %s154
      %p168 = scmp.eq.s32.totalorder %s20, 1
      %p169 = por %p167, %p168
      %p171 = scmp.ne.s32.totalorder %s154, %s170
      %p172 = scmp.eq.s32.totalorder %s20, 0
      %p173 = por %p171, %p172
      %p174 = scmp.le.s32.totalorder 1, %s14
      %p175 = scmp.lt.s32.totalorder %s14, 3
      %p176 = pnand %p174, %p175
      %p177 = pneg %p176
      // Predicated region
      $region9: #{tpu_custom_call.1} parent=5 // pred_check
        _
      $region10: #{tpu_custom_call.1} parent=5 // pred_check_branch
        %179 = sbr.rel (%p176) target = $region12
      $region11: #{tpu_custom_call.1} parent=5 // pred_region
        %s180 = ssub.s32 %s14, 1
        // Predicated region
        $region13: #{tpu_custom_call.1} parent=11 // pred_check
          %p181 = pneg %p75
        $region14: #{tpu_custom_call.1} parent=11 // pred_check_branch
          %183 = sbr.rel (%p181) target = $region16
        $region15: #{tpu_custom_call.1} parent=11 // pred_region
          _
        $region16: #{tpu_custom_call.1} parent=11 // pred_fallthru
          _
        // Predicated region
        $region17: #{tpu_custom_call.1} parent=11 // pred_check
          %p184 = pneg %p96
        $region18: #{tpu_custom_call.1} parent=11 // pred_check_branch
          %186 = sbr.rel (%p184) target = $region20
        $region19: #{tpu_custom_call.1} parent=11 // pred_region
          _
        $region20: #{tpu_custom_call.1} parent=11 // pred_fallthru
          _
        // Predicated region
        $region21: #{tpu_custom_call.1} parent=11 // pred_check
          %p187 = pneg %p117
        $region22: #{tpu_custom_call.1} parent=11 // pred_check_branch
          %189 = sbr.rel (%p187) target = $region24
        $region23: #{tpu_custom_call.1} parent=11 // pred_region
          _
        $region24: #{tpu_custom_call.1} parent=11 // pred_fallthru
          _
        // Predicated region
        $region25: #{tpu_custom_call.1} parent=11 // pred_check
          %p190 = pneg %p138
        $region26: #{tpu_custom_call.1} parent=11 // pred_check_branch
          %192 = sbr.rel (%p190) target = $region28
        $region27: #{tpu_custom_call.1} parent=11 // pred_region
          _
        $region28: #{tpu_custom_call.1} parent=11 // pred_fallthru
          _
      $region12: #{tpu_custom_call.1} parent=5 // pred_fallthru
        _
      %p193 = scmp.lt.s32.totalorder %s14, 2
      // Predicated region
      $region29: #{tpu_custom_call.1} parent=5 // pred_check
        %p194 = pneg %p193
      $region30: #{tpu_custom_call.1} parent=5 // pred_check_branch
        %196 = sbr.rel (%p194) target = $region32
      $region31: #{tpu_custom_call.1} parent=5 // pred_region
        // Predicated region
        $region33: #{tpu_custom_call.1} parent=31 // pred_check
          %p197 = pneg %p48
        $region34: #{tpu_custom_call.1} parent=31 // pred_check_branch
          %199 = sbr.rel (%p197) target = $region36
        $region35: #{tpu_custom_call.1} parent=31 // pred_region
          %s200 = smul.u32 2, %s22
          %p201 = scmp.lt.s32.totalorder %s21, 1
          %s202 = scalar_select %p201, %s21, 1
          %p203 = scmp.lt.s32.totalorder %s200, 1
          %s204 = scalar_select %p203, %s200, 1
          %s205 = smul.addr %s202, 8
          %s206 = sadd.s32 %s204, %s205
          %s207 = smul.addr %s206, 8
          %s208 = scalar_lea.vmem %s0, %s207
          %s209 = smul.u32 2, %s22
        $region36: #{tpu_custom_call.1} parent=31 // pred_fallthru
          _
      $region32: #{tpu_custom_call.1} parent=5 // pred_fallthru
        _
      %p210 = scmp.le.s32.totalorder 1, %s14
      %p211 = scmp.lt.s32.totalorder %s14, 3
      %p212 = pnand %p210, %p211
      %p213 = pneg %p212
      // Predicated region
      $region37: #{tpu_custom_call.1} parent=5 // pred_check
        _
      $region38: #{tpu_custom_call.1} parent=5 // pred_check_branch
        %215 = sbr.rel (%p212) target = $region40
      $region39: #{tpu_custom_call.1} parent=5 // pred_region
        %s216 = ssub.s32 %s14, 1
        %s217 = smul.u32 2, %s24
        %p218 = scmp.lt.s32.totalorder %s23, 1
        %s219 = scalar_select %p218, %s23, 1
        %p220 = scmp.lt.s32.totalorder %s217, 1
        %s221 = scalar_select %p220, %s217, 1
        %s222 = smul.addr %s219, 8
        %s223 = sadd.s32 %s221, %s222
        %s224 = smul.addr %s223, 8
        %s225 = scalar_lea.vmem %s0, %s224
        %p226 = pneg %p54
        %p227 = pneg %p51
        %p228 = pneg %p75
        %p229 = pneg %p72
        %p230 = pneg %p96
        %p231 = pneg %p93
        %p232 = pneg %p117
        %p233 = pneg %p114
        %p234 = pneg %p138
        %p235 = pneg %p135
        %p236 = pneg %p166
        %p237 = pneg %p163
        %s238 = sand.u32 %s153, 1
        %s239 = scalar_lea.sflag [#allocation3], %s238
        %s240 = sand.u32 %s153, 1
        %s241 = smul.addr %s240, 16
        %s242 = scalar_lea.vmem [#allocation2], %s241
        %s243 = smul.u32 2, %s24
        %p244 = scmp.lt.s32.totalorder %s23, 1
        %s245 = scalar_select %p244, %s23, 1
        %p246 = scmp.lt.s32.totalorder %s243, 1
        %s247 = scalar_select %p246, %s243, 1
        %s248 = smul.addr %s245, 8
        %s249 = sadd.s32 %s247, %s248
        %s250 = smul.addr %s249, 8
        %s251 = scalar_lea.vmem %s0, %s250
        %s252 = smul.u32 2, %s24
        %s253 = smul.u32 2, %s24
        %v254 = vld [vmem:[%s251] sm:$0xff]
        %v255 = vld [vmem:[%s251 + $0x8] sm:$0xff]
        %v256 = vld [vmem:[%s251 + $0x10] sm:$0xff]
        %v257 = vld [vmem:[%s251 + $0x18] sm:$0xff]
        %v258 = vld [vmem:[%s251 + $0x20] sm:$0xff]
        %v259 = vld [vmem:[%s251 + $0x28] sm:$0xff]
        %v260 = vld [vmem:[%s251 + $0x30] sm:$0xff]
        %v261 = vld [vmem:[%s251 + $0x38] sm:$0xff]
        %v262 = vld [vmem:[%s1] sm:$0xff]
        %v263 = vld [vmem:[%s1 + $0x8] sm:$0xff]
        %v264 = vld [vmem:[%s1 + $0x10] sm:$0xff]
        %v265 = vld [vmem:[%s1 + $0x18] sm:$0xff]
        %v266 = vld [vmem:[%s1 + $0x20] sm:$0xff]
        %v267 = vld [vmem:[%s1 + $0x28] sm:$0xff]
        %v268 = vld [vmem:[%s1 + $0x30] sm:$0xff]
        %v269 = vld [vmem:[%s1 + $0x38] sm:$0xff]
        %v270 = vld [vmem:[%s1 + $0x40] sm:$0xff]
        %v271 = vld [vmem:[%s1 + $0x48] sm:$0xff]
        %v272 = vld [vmem:[%s1 + $0x50] sm:$0xff]
        %v273 = vld [vmem:[%s1 + $0x58] sm:$0xff]
        %v274 = vld [vmem:[%s1 + $0x60] sm:$0xff]
        %v275 = vld [vmem:[%s1 + $0x68] sm:$0xff]
        %v276 = vld [vmem:[%s1 + $0x70] sm:$0xff]
        %v277 = vld [vmem:[%s1 + $0x78] sm:$0xff]
        %v278 = vld [vmem:[%s2] sm:$0xff]
        %v279 = vld [vmem:[%s2 + $0x8] sm:$0xff]
        %v280 = vld [vmem:[%s2 + $0x10] sm:$0xff]
        %v281 = vld [vmem:[%s2 + $0x18] sm:$0xff]
        %v282 = vld [vmem:[%s2 + $0x20] sm:$0xff]
        %v283 = vld [vmem:[%s2 + $0x28] sm:$0xff]
        %v284 = vld [vmem:[%s2 + $0x30] sm:$0xff]
        %v285 = vld [vmem:[%s2 + $0x38] sm:$0xff]
        %v286 = vld [vmem:[%s2 + $0x40] sm:$0xff]
        %v287 = vld [vmem:[%s2 + $0x48] sm:$0xff]
        %v288 = vld [vmem:[%s2 + $0x50] sm:$0xff]
        %v289 = vld [vmem:[%s2 + $0x58] sm:$0xff]
        %v290 = vld [vmem:[%s2 + $0x60] sm:$0xff]
        %v291 = vld [vmem:[%s2 + $0x68] sm:$0xff]
        %v292 = vld [vmem:[%s2 + $0x70] sm:$0xff]
        %v293 = vld [vmem:[%s2 + $0x78] sm:$0xff]
        %295 = vset.pattern.permute.xlu0 0
        %296 = vperm.xlu0 %295, %v278
        %v297 = vpop.permute.xlu0 %296
        %300 = vset.pattern.permute.xlu0 0
        %301 = vperm.xlu0 %300, %v279
        %v302 = vpop.permute.xlu0 %301
        %305 = vset.pattern.permute.xlu0 0
        %306 = vperm.xlu0 %305, %v280
        %v307 = vpop.permute.xlu0 %306
        %310 = vset.pattern.permute.xlu0 0
        %311 = vperm.xlu0 %310, %v281
        %v312 = vpop.permute.xlu0 %311
        %315 = vset.pattern.permute.xlu0 0
        %316 = vperm.xlu0 %315, %v282
        %v317 = vpop.permute.xlu0 %316
        %320 = vset.pattern.permute.xlu0 0
        %321 = vperm.xlu0 %320, %v283
        %v322 = vpop.permute.xlu0 %321
        %325 = vset.pattern.permute.xlu0 0
        %326 = vperm.xlu0 %325, %v284
        %v327 = vpop.permute.xlu0 %326
        %330 = vset.pattern.permute.xlu0 0
        %331 = vperm.xlu0 %330, %v285
        %v332 = vpop.permute.xlu0 %331
        %335 = vset.pattern.permute.xlu0 0
        %336 = vperm.xlu0 %335, %v286
        %v337 = vpop.permute.xlu0 %336
        %340 = vset.pattern.permute.xlu0 0
        %341 = vperm.xlu0 %340, %v287
        %v342 = vpop.permute.xlu0 %341
        %345 = vset.pattern.permute.xlu0 0
        %346 = vperm.xlu0 %345, %v288
        %v347 = vpop.permute.xlu0 %346
        %350 = vset.pattern.permute.xlu0 0
        %351 = vperm.xlu0 %350, %v289
        %v352 = vpop.permute.xlu0 %351
        %355 = vset.pattern.permute.xlu0 0
        %356 = vperm.xlu0 %355, %v290
        %v357 = vpop.permute.xlu0 %356
        %360 = vset.pattern.permute.xlu0 0
        %361 = vperm.xlu0 %360, %v291
        %v362 = vpop.permute.xlu0 %361
        %365 = vset.pattern.permute.xlu0 0
        %366 = vperm.xlu0 %365, %v292
        %v367 = vpop.permute.xlu0 %366
        %370 = vset.pattern.permute.xlu0 0
        %371 = vperm.xlu0 %370, %v293
        %v372 = vpop.permute.xlu0 %371
        %vm374 = vcmask 261120
        %v376 = vsel %vm374, %v262, 0
        %v379 = vsel %vm374, %v263, 0
        %v382 = vsel %vm374, %v264, 0
        %v385 = vsel %vm374, %v265, 0
        %v388 = vsel %vm374, %v266, 0
        %v391 = vsel %vm374, %v267, 0
        %v394 = vsel %vm374, %v268, 0
        %v397 = vsel %vm374, %v269, 0
        %v400 = vsel %vm374, %v270, 0
        %v403 = vsel %vm374, %v271, 0
        %v406 = vsel %vm374, %v272, 0
        %v409 = vsel %vm374, %v273, 0
        %v412 = vsel %vm374, %v274, 0
        %v415 = vsel %vm374, %v275, 0
        %v418 = vsel %vm374, %v276, 0
        %v421 = vsel %vm374, %v277, 0
        %423 = vmatprep.subr.mxu0 %v255
        %424 = vmatpush1.msra.mxu0 %v254
        %425 = vmatprep.subr.mxu0 %v257
        %426 = vmatpush1.msra.mxu0 %v256
        %427 = vmatprep.subr.mxu0 %v259
        %428 = vmatpush1.msra.mxu0 %v258
        %429 = vmatprep.subr.mxu0 %v261
        %430 = vmatpush1.msra.mxu0 %v260
        %431 = vmatprep.subr.mxu0 0.0
        %432 = vmatpush1.msra.mxu0 0.0
        %433 = vmatprep.subr.mxu0 0.0
        %434 = vmatpush1.msra.mxu0 0.0
        %435 = vmatprep.subr.mxu0 0.0
        %436 = vmatpush1.msra.mxu0 0.0
        %437 = vmatprep.subr.mxu0 0.0
        %438 = vmatpush1.msra.mxu0 0.0
        %439 = vmatprep.subr.mxu0 0.0
        %440 = vmatpush1.msra.mxu0 0.0
        %441 = vmatprep.subr.mxu0 0.0
        %442 = vmatpush1.msra.mxu0 0.0
        %443 = vmatprep.subr.mxu0 0.0
        %444 = vmatpush1.msra.mxu0 0.0
        %445 = vmatprep.subr.mxu0 0.0
        %446 = vmatpush1.msra.mxu0 0.0
        %447 = vmatprep.subr.mxu0 0.0
        %448 = vmatpush1.msra.mxu0 0.0
        %449 = vmatprep.subr.mxu0 0.0
        %450 = vmatpush1.msra.mxu0 0.0
        %451 = vmatprep.subr.mxu0 0.0
        %452 = vmatpush1.msra.mxu0 0.0
        %453 = vmatprep.subr.mxu0 0.0
        %454 = vmatpush1.msra.mxu0 0.0
        %455 = vmatprep.subr.mxu0 0.0
        %456 = vmatpush1.msra.mxu0 0.0
        %457 = vmatprep.subr.mxu0 0.0
        %458 = vmatpush1.msra.mxu0 0.0
        %459 = vmatprep.subr.mxu0 0.0
        %460 = vmatpush1.msra.mxu0 0.0
        %461 = vmatprep.subr.mxu0 0.0
        %462 = vmatpush1.msra.mxu0 0.0
        %463 = vmatprep.subr.mxu0 0.0
        %464 = vmatpush1.msra.mxu0 0.0
        %465 = vmatprep.subr.mxu0 0.0
        %466 = vmatpush1.msra.mxu0 0.0
        %467 = vmatprep.subr.mxu0 0.0
        %468 = vmatpush1.msra.mxu0 0.0
        %469 = vmatprep.subr.mxu0 0.0
        %470 = vmatpush1.msra.mxu0 0.0
        %471 = vmatprep.subr.mxu0 0.0
        %472 = vmatpush1.msra.mxu0 0.0
        %473 = vmatprep.subr.mxu0 0.0
        %474 = vmatpush1.msra.mxu0 0.0
        %475 = vmatprep.subr.mxu0 0.0
        %476 = vmatpush1.msra.mxu0 0.0
        %477 = vmatprep.subr.mxu0 0.0
        %478 = vmatpush1.msra.mxu0 0.0
        %479 = vmatprep.subr.mxu0 0.0
        %480 = vmatpush1.msra.mxu0 0.0
        %481 = vmatprep.subr.mxu0 0.0
        %482 = vmatpush1.msra.mxu0 0.0
        %483 = vmatprep.subr.mxu0 0.0
        %484 = vmatpush1.msra.mxu0 0.0
        %485 = vmatprep.subr.mxu0 0.0
        %486 = vmatpush1.msra.mxu0 0.0
        %487 = vmatprep.mubr.f32.mxu0 0.0
        %488 = vmatmul.mubr.f32.gmra.mrb[0].mxu0 %v376
        %v489 = vpop.f32.mrb[0].mxu0
        %v490 = vadd.f32 %v297, %v489
        %v491 = vpop.f32.mrb[0].mxu0
        %v492 = vadd.f32 %v297, %v491
        %493 = vmatprep.mubr.f32.mxu0 0.0
        %494 = vmatmul.mubr.f32.gmra.mrb[0].mxu0 %v379
        %v495 = vpop.f32.mrb[0].mxu0
        %v496 = vadd.f32 %v302, %v495
        %v497 = vpop.f32.mrb[0].mxu0
        %v498 = vadd.f32 %v302, %v497
        %499 = vmatprep.mubr.f32.mxu0 0.0
        %500 = vmatmul.mubr.f32.gmra.mrb[0].mxu0 %v382
        %v501 = vpop.f32.mrb[0].mxu0
        %v502 = vadd.f32 %v307, %v501
        %v503 = vpop.f32.mrb[0].mxu0
        %v504 = vadd.f32 %v307, %v503
        %505 = vmatprep.mubr.f32.mxu0 0.0
        %506 = vmatmul.mubr.f32.gmra.mrb[0].mxu0 %v385
        %v507 = vpop.f32.mrb[0].mxu0
        %v508 = vadd.f32 %v312, %v507
        %v509 = vpop.f32.mrb[0].mxu0
        %v510 = vadd.f32 %v312, %v509
        %511 = vmatprep.mubr.f32.mxu0 0.0
        %512 = vmatmul.mubr.f32.gmra.mrb[0].mxu0 %v388
        %v513 = vpop.f32.mrb[0].mxu0
        %v514 = vadd.f32 %v317, %v513
        %v515 = vpop.f32.mrb[0].mxu0
        %v516 = vadd.f32 %v317, %v515
        %517 = vmatprep.mubr.f32.mxu0 0.0
        %518 = vmatmul.mubr.f32.gmra.mrb[0].mxu0 %v391
        %v519 = vpop.f32.mrb[0].mxu0
        %v520 = vadd.f32 %v322, %v519
        %v521 = vpop.f32.mrb[0].mxu0
        %v522 = vadd.f32 %v322, %v521
        %523 = vmatprep.mubr.f32.mxu0 0.0
        %524 = vmatmul.mubr.f32.gmra.mrb[0].mxu0 %v394
        %v525 = vpop.f32.mrb[0].mxu0
        %v526 = vadd.f32 %v327, %v525
        %v527 = vpop.f32.mrb[0].mxu0
        %v528 = vadd.f32 %v327, %v527
        %529 = vmatprep.mubr.f32.mxu0 0.0
        %530 = vmatmul.mubr.f32.gmra.mrb[0].mxu0 %v397
        %v531 = vpop.f32.mrb[0].mxu0
        %v532 = vadd.f32 %v332, %v531
        %v533 = vpop.f32.mrb[0].mxu0
        %v534 = vadd.f32 %v332, %v533
        %535 = vmatprep.mubr.f32.mxu0 0.0
        %536 = vmatmul.mubr.f32.gmra.mrb[0].mxu0 %v400
        %v537 = vpop.f32.mrb[0].mxu0
        %v538 = vadd.f32 %v337, %v537
        %v539 = vpop.f32.mrb[0].mxu0
        %v540 = vadd.f32 %v337, %v539
        %541 = vmatprep.mubr.f32.mxu0 0.0
        %542 = vmatmul.mubr.f32.gmra.mrb[0].mxu0 %v403
        %v543 = vpop.f32.mrb[0].mxu0
        %v544 = vadd.f32 %v342, %v543
        %v545 = vpop.f32.mrb[0].mxu0
        %v546 = vadd.f32 %v342, %v545
        %547 = vmatprep.mubr.f32.mxu0 0.0
        %548 = vmatmul.mubr.f32.gmra.mrb[0].mxu0 %v406
        %v549 = vpop.f32.mrb[0].mxu0
        %v550 = vadd.f32 %v347, %v549
        %v551 = vpop.f32.mrb[0].mxu0
        %v552 = vadd.f32 %v347, %v551
        %553 = vmatprep.mubr.f32.mxu0 0.0
        %554 = vmatmul.mubr.f32.gmra.mrb[0].mxu0 %v409
        %v555 = vpop.f32.mrb[0].mxu0
        %v556 = vadd.f32 %v352, %v555
        %v557 = vpop.f32.mrb[0].mxu0
        %v558 = vadd.f32 %v352, %v557
        %559 = vmatprep.mubr.f32.mxu0 0.0
        %560 = vmatmul.mubr.f32.gmra.mrb[0].mxu0 %v412
        %v561 = vpop.f32.mrb[0].mxu0
        %v562 = vadd.f32 %v357, %v561
        %v563 = vpop.f32.mrb[0].mxu0
        %v564 = vadd.f32 %v357, %v563
        %565 = vmatprep.mubr.f32.mxu0 0.0
        %566 = vmatmul.mubr.f32.gmra.mrb[0].mxu0 %v415
        %v567 = vpop.f32.mrb[0].mxu0
        %v568 = vadd.f32 %v362, %v567
        %v569 = vpop.f32.mrb[0].mxu0
        %v570 = vadd.f32 %v362, %v569
        %571 = vmatprep.mubr.f32.mxu0 0.0
        %572 = vmatmul.mubr.f32.gmra.mrb[0].mxu0 %v418
        %v573 = vpop.f32.mrb[0].mxu0
        %v574 = vadd.f32 %v367, %v573
        %v575 = vpop.f32.mrb[0].mxu0
        %v576 = vadd.f32 %v367, %v575
        %577 = vmatprep.mubr.f32.mxu0 0.0
        %578 = vmatmul.mubr.f32.gmra.mrb[0].mxu0 %v421
        %v579 = vpop.f32.mrb[0].mxu0
        %v580 = vadd.f32 %v372, %v579
        %v581 = vpop.f32.mrb[0].mxu0
        %v582 = vadd.f32 %v372, %v581
        %583 = vdwg.mxu0
        %v584 = vmax.f32 %v490, 0.0
        %v585 = vmax.f32 %v492, 0.0
        %v586 = vmax.f32 %v496, 0.0
        %v587 = vmax.f32 %v498, 0.0
        %v588 = vmax.f32 %v502, 0.0
        %v589 = vmax.f32 %v504, 0.0
        %v590 = vmax.f32 %v508, 0.0
        %v591 = vmax.f32 %v510, 0.0
        %v592 = vmax.f32 %v514, 0.0
        %v593 = vmax.f32 %v516, 0.0
        %v594 = vmax.f32 %v520, 0.0
        %v595 = vmax.f32 %v522, 0.0
        %v596 = vmax.f32 %v526, 0.0
        %v597 = vmax.f32 %v528, 0.0
        %v598 = vmax.f32 %v532, 0.0
        %v599 = vmax.f32 %v534, 0.0
        %v600 = vmax.f32 %v538, 0.0
        %v601 = vmax.f32 %v540, 0.0
        %v602 = vmax.f32 %v544, 0.0
        %v603 = vmax.f32 %v546, 0.0
        %v604 = vmax.f32 %v550, 0.0
        %v605 = vmax.f32 %v552, 0.0
        %v606 = vmax.f32 %v556, 0.0
        %v607 = vmax.f32 %v558, 0.0
        %v608 = vmax.f32 %v562, 0.0
        %v609 = vmax.f32 %v564, 0.0
        %v610 = vmax.f32 %v568, 0.0
        %v611 = vmax.f32 %v570, 0.0
        %v612 = vmax.f32 %v574, 0.0
        %v613 = vmax.f32 %v576, 0.0
        %v614 = vmax.f32 %v580, 0.0
        %v615 = vmax.f32 %v582, 0.0
        %v616 = vld [vmem:[%s3] sm:$0xff]
        %v617 = vld [vmem:[%s4] sm:$0xff]
        %619 = vset.pattern.permute.xlu0 0
        %620 = vperm.xlu0 %619, %v617
        %v621 = vpop.permute.xlu0 %620
        %623 = vmatprep.subr.mxu0 %v585
        %624 = vmatpush1.msra.mxu0 %v584
        %625 = vmatprep.subr.mxu0 %v587
        %626 = vmatpush1.msra.mxu0 %v586
        %627 = vmatprep.subr.mxu0 %v589
        %628 = vmatpush1.msra.mxu0 %v588
        %629 = vmatprep.subr.mxu0 %v591
        %630 = vmatpush1.msra.mxu0 %v590
        %631 = vmatprep.subr.mxu0 %v593
        %632 = vmatpush1.msra.mxu0 %v592
        %633 = vmatprep.subr.mxu0 %v595
        %634 = vmatpush1.msra.mxu0 %v594
        %635 = vmatprep.subr.mxu0 %v597
        %636 = vmatpush1.msra.mxu0 %v596
        %637 = vmatprep.subr.mxu0 %v599
        %638 = vmatpush1.msra.mxu0 %v598
        %639 = vmatprep.subr.mxu0 %v601
        %640 = vmatpush1.msra.mxu0 %v600
        %641 = vmatprep.subr.mxu0 %v603
        %642 = vmatpush1.msra.mxu0 %v602
        %643 = vmatprep.subr.mxu0 %v605
        %644 = vmatpush1.msra.mxu0 %v604
        %645 = vmatprep.subr.mxu0 %v607
        %646 = vmatpush1.msra.mxu0 %v606
        %647 = vmatprep.subr.mxu0 %v609
        %648 = vmatpush1.msra.mxu0 %v608
        %649 = vmatprep.subr.mxu0 %v611
        %650 = vmatpush1.msra.mxu0 %v610
        %651 = vmatprep.subr.mxu0 %v613
        %652 = vmatpush1.msra.mxu0 %v612
        %653 = vmatprep.subr.mxu0 %v615
        %654 = vmatpush1.msra.mxu0 %v614
        %655 = vmatprep.subr.mxu0 0.0
        %656 = vmatpush1.msra.mxu0 0.0
        %657 = vmatprep.subr.mxu0 0.0
        %658 = vmatpush1.msra.mxu0 0.0
        %659 = vmatprep.subr.mxu0 0.0
        %660 = vmatpush1.msra.mxu0 0.0
        %661 = vmatprep.subr.mxu0 0.0
        %662 = vmatpush1.msra.mxu0 0.0
        %663 = vmatprep.subr.mxu0 0.0
        %664 = vmatpush1.msra.mxu0 0.0
        %665 = vmatprep.subr.mxu0 0.0
        %666 = vmatpush1.msra.mxu0 0.0
        %667 = vmatprep.subr.mxu0 0.0
        %668 = vmatpush1.msra.mxu0 0.0
        %669 = vmatprep.subr.mxu0 0.0
        %670 = vmatpush1.msra.mxu0 0.0
        %671 = vmatprep.subr.mxu0 0.0
        %672 = vmatpush1.msra.mxu0 0.0
        %673 = vmatprep.subr.mxu0 0.0
        %674 = vmatpush1.msra.mxu0 0.0
        %675 = vmatprep.subr.mxu0 0.0
        %676 = vmatpush1.msra.mxu0 0.0
        %677 = vmatprep.subr.mxu0 0.0
        %678 = vmatpush1.msra.mxu0 0.0
        %679 = vmatprep.subr.mxu0 0.0
        %680 = vmatpush1.msra.mxu0 0.0
        %681 = vmatprep.subr.mxu0 0.0
        %682 = vmatpush1.msra.mxu0 0.0
        %683 = vmatprep.subr.mxu0 0.0
        %684 = vmatpush1.msra.mxu0 0.0
        %685 = vmatprep.subr.mxu0 0.0
        %686 = vmatpush1.msra.mxu0 0.0
        %687 = vmatprep.mubr.f32.mxu0 0.0
        %688 = vmatmul.mubr.f32.gmra.mrb[0].mxu0 %v616
        %v689 = vpop.f32.mrb[0].mxu0
        %v690 = vadd.f32 %v621, %v689
        %v691 = vpop.f32.mrb[0].mxu0
        %v692 = vadd.f32 %v621, %v691
        %693 = vdwg.mxu0
        %694 = vst [vmem:[%s242] sm:$0xff] %v690
        %695 = vst [vmem:[%s242 + $0x8] sm:$0xff] %v692
        %s696 = sand.u32 %s153, 1
        %s697 = scalar_lea.sflag [#allocation3], %s696
        %s698 = sand.u32 %s153, 1
        %s699 = smul.addr %s698, 16
        %s700 = scalar_lea.vmem [#allocation2], %s699
        // Predicated region
        $region41: #{tpu_custom_call.1} parent=39 // pred_check
          %p701 = pneg %p163
        $region42: #{tpu_custom_call.1} parent=39 // pred_check_branch
          %703 = sbr.rel (%p701) target = $region44
        $region43: #{tpu_custom_call.1} parent=39 // pred_region
          %s704 = smul.u32 2, %s24
          %s706 = ssub.s32 256, 256
          %707 = vsyncadd %s697, %s706
          %s708 = smul.addr %s23, 2
          %s709 = sadd.s32 %s704, %s708
          %s710 = smul.addr %s709, 128
          %s711 = scalar_lea.hbm %s5, %s710
          %s713 = sshll.u32 %s700, 4
          %s714 = int_to_ptr.vmem [resolvable:$true] %s713
          %716 = dma.vmem_to_hbm [thread:$0]  %s714, 256, %s711, %s697
        $region44: #{tpu_custom_call.1} parent=39 // pred_fallthru
          _
      $region40: #{tpu_custom_call.1} parent=5 // pred_fallthru
        _
      %p717 = scmp.le.s32.totalorder 2, %s14
      // Predicated region
      $region45: #{tpu_custom_call.1} parent=5 // pred_check
        %p718 = pneg %p717
      $region46: #{tpu_custom_call.1} parent=5 // pred_check_branch
        %720 = sbr.rel (%p718) target = $region48
      $region47: #{tpu_custom_call.1} parent=5 // pred_region
        %s721 = ssub.s32 %s14, 2
        // Predicated region
        $region49: #{tpu_custom_call.1} parent=47 // pred_check
          %p722 = pneg %p169
        $region50: #{tpu_custom_call.1} parent=47 // pred_check_branch
          %724 = sbr.rel (%p722) target = $region52
        $region51: #{tpu_custom_call.1} parent=47 // pred_region
          %s725 = sand.u32 %s154, 1
          %s726 = scalar_lea.sflag [#allocation3], %s725
          %s727 = sand.u32 %s154, 1
          %s728 = smul.addr %s727, 16
          %s729 = scalar_lea.vmem [#allocation2], %s728
          %730 = dma.done %s726, 256
        $region52: #{tpu_custom_call.1} parent=47 // pred_fallthru
          _
      $region48: #{tpu_custom_call.1} parent=5 // pred_fallthru
        _
    $region6: #{tpu_custom_call.1} parent=1 // loop_footer
      %s18 = sadd.s32 1, %s14
    $region7: #{tpu_custom_call.1} parent=1 // loop_footer_branch
      %13 = sbr.rel target = $region3
    $region8: #{tpu_custom_call.1} parent=1 // loop_exit
      _
    %731 = vsyncpa [#allocation3], 1
    %s732 = scalar_lea.sflag [#allocation3], 1
    %733 = vsyncpa %s732, 1

</llo_original>
